<compile_context>
chip_gen: v7x
topology: tpu7x:2x2x1
jax: 0.10.0
libtpu: 0.0.40
codegen_flags: <defaults>
</compile_context>

<pallas_src>
import functools

import jax
import jax.numpy as jnp
from jax.experimental import pallas as pl
from jax.experimental.pallas import tpu as pltpu

EPS = 1e-3          # matches BatchNorm2d(..., eps=0.001) in the module spec
COUT_PAD = 1024     # 960 padded up to a multiple of 128 (lane-dense MXU tiles)


def conv1x1_bn_kernel(x_ref, w_ref, gamma_ref, beta_ref, o_ref, *, m_true):
    # x_ref: [M_pad, Cin], w_ref: [Cin, Cout_pad], gamma/beta: [1, Cout_pad],
    # o_ref: [M_pad, Cout_pad].  Padded rows of x and padded cols of w are zero.
    y = jnp.dot(x_ref[...], w_ref[...], preferred_element_type=jnp.float32)

    # Single-pass batch statistics: zero-padded rows contribute 0 to both sums,
    # so dividing by the true element count (49) gives exact batch mean/var.
    inv_m = jnp.float32(1.0 / m_true)
    s1 = jnp.sum(y, axis=0, keepdims=True)            # [1, Cout_pad]
    s2 = jnp.sum(y * y, axis=0, keepdims=True)        # [1, Cout_pad]
    mean = s1 * inv_m
    var = s2 * inv_m - mean * mean                    # biased (train-mode) var
    inv_std = jax.lax.rsqrt(var + jnp.float32(EPS))

    # Fold BN affine into one scale/bias sweep over the [M_pad, Cout_pad] tile.
    # Padded channels: y=0 -> mean=var=0, scale=gamma_pad(0)*rsqrt(eps)=0, bias=0.
    scale = inv_std * gamma_ref[...]                  # [1, Cout_pad]
    bias = beta_ref[...] - mean * scale               # [1, Cout_pad]
    o_ref[...] = (y * scale + bias).astype(o_ref.dtype)


def prepare_params(w_oihw, gamma, beta, cout_pad=COUT_PAD):
    """One-time (init-time) weight-side preprocessing: reshape + zero-pad Cout."""
    cout, cin = w_oihw.shape[0], w_oihw.shape[1]
    pad = cout_pad - cout
    w2d = jnp.transpose(w_oihw.reshape(cout, cin), (1, 0))        # [Cin, Cout]
    w2d = jnp.pad(w2d, ((0, 0), (0, pad)))                        # [Cin, Cout_pad]
    g2d = jnp.pad(gamma.reshape(1, cout), ((0, 0), (0, pad)))     # [1, Cout_pad]
    b2d = jnp.pad(beta.reshape(1, cout), ((0, 0), (0, pad)))      # [1, Cout_pad]
    return w2d, g2d, b2d


@functools.partial(jax.jit, static_argnames=("cout",))
def conv1x1_bn(x_nchw, w2d, g2d, b2d, cout=960):
    N, Cin, H, W = x_nchw.shape
    M = N * H * W                                   # true batch-stat count (49)
    M_pad = ((M + 7) // 8) * 8                      # sublane-aligned rows (56)
    cout_pad = w2d.shape[1]

    # NCHW -> [M, Cin] -> zero-pad rows to a sublane multiple.
    x2d = jnp.transpose(x_nchw, (0, 2, 3, 1)).reshape(M, Cin)
    x2d = jnp.pad(x2d, ((0, M_pad - M), (0, 0)))

    kernel = functools.partial(conv1x1_bn_kernel, m_true=float(M))

    out2d = pl.pallas_call(
        kernel,
        out_shape=jax.ShapeDtypeStruct((M_pad, cout_pad), jnp.float32),
        grid=(1,),
        in_specs=[
            pl.BlockSpec((M_pad, Cin), lambda j: (0, 0)),
            pl.BlockSpec((Cin, cout_pad), lambda j: (0, 0)),
            pl.BlockSpec((1, cout_pad), lambda j: (0, 0)),
            pl.BlockSpec((1, cout_pad), lambda j: (0, 0)),
        ],
        out_specs=pl.BlockSpec((M_pad, cout_pad), lambda j: (0, 0)),
        compiler_params=pltpu.CompilerParams(
            dimension_semantics=("arbitrary",)),
        cost_estimate=pl.CostEstimate(
            flops=2 * M_pad * Cin * cout_pad,
            bytes_accessed=(M_pad * Cin + Cin * cout_pad
                            + 2 * cout_pad + M_pad * cout_pad) * 4,
            transcendentals=0),
    )(x2d, w2d, g2d, b2d)

    # Drop padded rows / channels, restore NCHW.
    out2d = out2d[:M, :cout]
    return jnp.transpose(out2d.reshape(N, H, W, cout), (0, 3, 1, 2))


def reference(x_nchw, w_oihw, gamma, beta):
    # Pure-JAX reference (train-mode BN with batch stats, biased variance).
    y = jax.lax.conv_general_dilated(
        x_nchw, w_oihw, window_strides=(1, 1), padding="VALID",
        dimension_numbers=("NCHW", "OIHW", "NCHW"))
    mean = jnp.mean(y, axis=(0, 2, 3), keepdims=True)
    var = jnp.var(y, axis=(0, 2, 3), keepdims=True)
    return (y - mean) / jnp.sqrt(var + EPS) * gamma.reshape(1, -1, 1, 1) \
        + beta.reshape(1, -1, 1, 1)


if __name__ == "__main__":
    key = jax.random.PRNGKey(0)
    kx, kw, kg, kb = jax.random.split(key, 4)

    N, Cin, H, W, Cout = 1, 160, 7, 7, 960
    x = jax.random.normal(kx, (N, Cin, H, W), dtype=jnp.float32)
    w = jax.random.normal(kw, (Cout, Cin, 1, 1), dtype=jnp.float32) * 0.05
    gamma = jax.random.normal(kg, (Cout,), dtype=jnp.float32) * 0.1 + 1.0
    beta = jax.random.normal(kb, (Cout,), dtype=jnp.float32) * 0.1

    # Init-time weight prep (hoisted out of the per-call path).
    w2d, g2d, b2d = prepare_params(w, gamma, beta)

    out = conv1x1_bn(x, w2d, g2d, b2d, cout=Cout)
    jax.block_until_ready(out)

    ref = reference(x, w, gamma, beta)
    assert out.shape == (N, Cout, H, W), out.shape
    assert jnp.allclose(out, ref, atol=1e-3, rtol=1e-3), \
        float(jnp.max(jnp.abs(out - ref)))

    # TODO(synk): train-mode BN also updates running_mean/running_var with
    # momentum=0.01; only the forward output is computed here.

    print("KERNEL_OK")
</pallas_src>

<mosaic_0001>
module attributes {stable_mosaic.version = 11 : i64} {
  func.func @conv1x1_bn_kernel(%arg0: i32, %arg1: memref<56x160xf32, #tpu.memory_space<vmem>>, %arg2: memref<160x1024xf32, #tpu.memory_space<vmem>>, %arg3: memref<1x1024xf32, #tpu.memory_space<vmem>>, %arg4: memref<1x1024xf32, #tpu.memory_space<vmem>>, %arg5: memref<56x1024xf32, #tpu.memory_space<vmem>>) attributes {dimension_semantics = [#tpu.dimension_semantics<arbitrary>], iteration_bounds = array<i64: 1>, scalar_prefetch = 0 : i64, scratch_operands = 0 : i64, tpu.core_type = #tpu.core_type<tc>, window_params = [{pipeline_mode = #tpu.pipeline_mode<synchronous>, transform_indices = @transform_0, window_bounds = array<i64: 56, 160>}, {pipeline_mode = #tpu.pipeline_mode<synchronous>, transform_indices = @transform_1, window_bounds = array<i64: 160, 1024>}, {pipeline_mode = #tpu.pipeline_mode<synchronous>, transform_indices = @transform_2, window_bounds = array<i64: 1, 1024>}, {pipeline_mode = #tpu.pipeline_mode<synchronous>, transform_indices = @transform_3, window_bounds = array<i64: 1, 1024>}, {pipeline_mode = #tpu.pipeline_mode<synchronous>, transform_indices = @transform_4, window_bounds = array<i64: 56, 1024>}]} {
    %c0 = arith.constant 0 : index
    %c0_0 = arith.constant 0 : index
    %0 = vector.load %arg1[%c0, %c0_0] : memref<56x160xf32, #tpu.memory_space<vmem>>, vector<56x160xf32>
    %c0_1 = arith.constant 0 : index
    %c0_2 = arith.constant 0 : index
    %1 = vector.load %arg2[%c0_1, %c0_2] : memref<160x1024xf32, #tpu.memory_space<vmem>>, vector<160x1024xf32>
    %cst = arith.constant dense<0.000000e+00> : vector<56x1024xf32>
    %2 = tpu.matmul %0, %1, %cst {dimension_numbers = #tpu.dot_dimension_numbers<[1], [0], [0], [1], [0, 0, 1, 1], [], []>} : vector<56x160xf32>, vector<160x1024xf32>, vector<56x1024xf32> -> vector<56x1024xf32>
    %cst_3 = arith.constant dense<0.000000e+00> : vector<1024xf32>
    %3 = vector.multi_reduction <add>, %2, %cst_3 [0] : vector<56x1024xf32> to vector<1024xf32>
    %4 = vector.shape_cast %3 : vector<1024xf32> to vector<1x1024xf32>
    %5 = arith.mulf %2, %2 : vector<56x1024xf32>
    %cst_4 = arith.constant dense<0.000000e+00> : vector<1024xf32>
    %6 = vector.multi_reduction <add>, %5, %cst_4 [0] : vector<56x1024xf32> to vector<1024xf32>
    %7 = vector.shape_cast %6 : vector<1024xf32> to vector<1x1024xf32>
    %cst_5 = arith.constant 0.0204081628 : f32
    %8 = vector.broadcast %cst_5 : f32 to vector<1x1024xf32>
    %9 = arith.mulf %4, %8 : vector<1x1024xf32>
    %cst_6 = arith.constant 0.0204081628 : f32
    %10 = vector.broadcast %cst_6 : f32 to vector<1x1024xf32>
    %11 = arith.mulf %7, %10 : vector<1x1024xf32>
    %12 = arith.mulf %9, %9 : vector<1x1024xf32>
    %13 = arith.subf %11, %12 : vector<1x1024xf32>
    %cst_7 = arith.constant 1.000000e-03 : f32
    %14 = vector.broadcast %cst_7 : f32 to vector<1x1024xf32>
    %15 = arith.addf %13, %14 : vector<1x1024xf32>
    %16 = math.rsqrt %15 : vector<1x1024xf32>
    %c0_8 = arith.constant 0 : index
    %c0_9 = arith.constant 0 : index
    %17 = vector.load %arg3[%c0_8, %c0_9] : memref<1x1024xf32, #tpu.memory_space<vmem>>, vector<1x1024xf32>
    %18 = arith.mulf %16, %17 : vector<1x1024xf32>
    %c0_10 = arith.constant 0 : index
    %c0_11 = arith.constant 0 : index
    %19 = vector.load %arg4[%c0_10, %c0_11] : memref<1x1024xf32, #tpu.memory_space<vmem>>, vector<1x1024xf32>
    %20 = arith.mulf %9, %18 : vector<1x1024xf32>
    %21 = arith.subf %19, %20 : vector<1x1024xf32>
    %22 = vector.broadcast %18 : vector<1x1024xf32> to vector<56x1024xf32>
    %23 = arith.mulf %2, %22 : vector<56x1024xf32>
    %24 = vector.broadcast %21 : vector<1x1024xf32> to vector<56x1024xf32>
    %25 = arith.addf %23, %24 : vector<56x1024xf32>
    %c0_12 = arith.constant 0 : index
    %c0_13 = arith.constant 0 : index
    %26 = vector.load %arg5[%c0_12, %c0_13] : memref<56x1024xf32, #tpu.memory_space<vmem>>, vector<56x1024xf32>
    tpu.vector_store %arg5[%c0_12, %c0_13], %25 {strides = array<i32>} : memref<56x1024xf32, #tpu.memory_space<vmem>>, vector<56x1024xf32>,
    return
  }
  func.func @transform_0(%arg0: i32) -> (i32, i32) {
    %c0_i32 = arith.constant 0 : i32
    %c0_i32_0 = arith.constant 0 : i32
    %c0_i32_1 = arith.constant 0 : i32
    return %c0_i32, %c0_i32_0 : i32, i32
  }
  func.func @transform_1(%arg0: i32) -> (i32, i32) {
    %c0_i32 = arith.constant 0 : i32
    %c0_i32_0 = arith.constant 0 : i32
    %c0_i32_1 = arith.constant 0 : i32
    return %c0_i32, %c0_i32_0 : i32, i32
  }
  func.func @transform_2(%arg0: i32) -> (i32, i32) {
    %c0_i32 = arith.constant 0 : i32
    %c0_i32_0 = arith.constant 0 : i32
    %c0_i32_1 = arith.constant 0 : i32
    return %c0_i32, %c0_i32_0 : i32, i32
  }
  func.func @transform_3(%arg0: i32) -> (i32, i32) {
    %c0_i32 = arith.constant 0 : i32
    %c0_i32_0 = arith.constant 0 : i32
    %c0_i32_1 = arith.constant 0 : i32
    return %c0_i32, %c0_i32_0 : i32, i32
  }
  func.func @transform_4(%arg0: i32) -> (i32, i32) {
    %c0_i32 = arith.constant 0 : i32
    %c0_i32_0 = arith.constant 0 : i32
    %c0_i32_1 = arith.constant 0 : i32
    return %c0_i32, %c0_i32_0 : i32, i32
  }
}

</mosaic_0001>

<llo_original>
// kernel: conv1x1_bn.1
$region0: #{conv1x1_bn.1}
  #allocation0 [shape = 'u32[]', space=smem, size = 0x4, offset = 0x4, fixed_abs, tag = 'smem constant byte address 0x4 - core index']
  #allocation1 [shape = 'u32[144,128]{1,0:T(1,128)}', space=vmem, size = 0x12000, scoped, tag = 'internal scratch']
  %s0 = inlined_call_operand.vmem [shape: f32[56,160], index: 0, kind: input, shape index: {}]
  %s1 = inlined_call_operand.hbm [shape: f32[160,1024], index: 1, kind: input, shape index: {}]
  %s2 = inlined_call_operand.vmem [shape: f32[1,1024], index: 2, kind: input, shape index: {}]
  %s3 = inlined_call_operand.vmem [shape: f32[1,1024], index: 3, kind: input, shape index: {}]
  %s4 = inlined_call_operand.vmem [shape: f32[56,1024], index: 4, kind: output, shape index: {}]
  %s5 = sld [smem:[#allocation0]]
  $region30: #{conv1x1_bn.1} parent=0
    _
  %s7 = ssub.s32 1, %s5
  %s8 = scalar_select 0, %s7, %s5
  $region1: #{conv1x1_bn.1} parent=0
    #allocation2 [shape = 'u8[655360]{0}', space=vmem, size = 0xa0000, scoped, tag = 'input window, operand 1, single buffered']
    #allocation3 [shape = 's32[1]{0}', space=sflag, size = 0x4, scoped, tag = 'scoped memory for conv1x1_bn.1']
    %9 = vsyncpa [#allocation3], 0
    // Predicated region
    $region2: #{conv1x1_bn.1} parent=1 // pred_check
      _
    $region3: #{conv1x1_bn.1} parent=1 // pred_check_branch
      %11 = sbr.rel (0) target = $region5
    $region4: #{conv1x1_bn.1} parent=1 // pred_region
      _
    $region5: #{conv1x1_bn.1} parent=1 // pred_fallthru
      _
    // Predicated region
    $region6: #{conv1x1_bn.1} parent=1 // pred_check
      _
    $region7: #{conv1x1_bn.1} parent=1 // pred_check_branch
      %13 = sbr.rel (0) target = $region9
    $region8: #{conv1x1_bn.1} parent=1 // pred_region
      %s15 = ssub.s32 20480, 20480
      %16 = vsyncadd [#allocation3], %s15
      %s17 = sshll.u32 [#allocation2], 4
      %s18 = int_to_ptr.vmem [resolvable:$true] %s17
      %23 = dma.hbm_to_vmem [thread:$0]  %s1, 20480, %s18, [#allocation3], 1024, 1024, 64
    $region9: #{conv1x1_bn.1} parent=1 // pred_fallthru
      _
    // Predicated region
    $region10: #{conv1x1_bn.1} parent=1 // pred_check
      _
    $region11: #{conv1x1_bn.1} parent=1 // pred_check_branch
      %25 = sbr.rel (0) target = $region13
    $region12: #{conv1x1_bn.1} parent=1 // pred_region
      _
    $region13: #{conv1x1_bn.1} parent=1 // pred_fallthru
      _
    // Predicated region
    $region14: #{conv1x1_bn.1} parent=1 // pred_check
      _
    $region15: #{conv1x1_bn.1} parent=1 // pred_check_branch
      %27 = sbr.rel (0) target = $region17
    $region16: #{conv1x1_bn.1} parent=1 // pred_region
      _
    $region17: #{conv1x1_bn.1} parent=1 // pred_fallthru
      _
    // Predicated region
    $region18: #{conv1x1_bn.1} parent=1 // pred_check
      _
    $region19: #{conv1x1_bn.1} parent=1 // pred_check_branch
      %29 = sbr.rel (0) target = $region21
    $region20: #{conv1x1_bn.1} parent=1 // pred_region
      %30 = dma.done [#allocation3], 20480
    $region21: #{conv1x1_bn.1} parent=1 // pred_fallthru
      _
    %v31 = vld [vmem:[%s0] sm:$0xff]
    %v32 = vld [vmem:[%s0 + $0x8] sm:$0xff]
    %v33 = vld [vmem:[%s0 + $0x10] sm:$0xff]
    %v34 = vld [vmem:[%s0 + $0x18] sm:$0xff]
    %v35 = vld [vmem:[%s0 + $0x20] sm:$0xff]
    %v36 = vld [vmem:[%s0 + $0x28] sm:$0xff]
    %v37 = vld [vmem:[%s0 + $0x30] sm:$0xff]
    %v38 = vld [vmem:[%s0 + $0x38] sm:$0xff]
    %v39 = vld [vmem:[%s0 + $0x40] sm:$0xff]
    %v40 = vld [vmem:[%s0 + $0x48] sm:$0xff]
    %v41 = vld [vmem:[%s0 + $0x50] sm:$0xff]
    %v42 = vld [vmem:[%s0 + $0x58] sm:$0xff]
    %v43 = vld [vmem:[%s0 + $0x60] sm:$0xff]
    %v44 = vld [vmem:[%s0 + $0x68] sm:$0xff]
    %v45 = vld [vmem:[#allocation2] sm:$0xff]
    %v46 = vld [vmem:[#allocation2 + $0x8] sm:$0xff]
    %v47 = vld [vmem:[#allocation2 + $0x10] sm:$0xff]
    %v48 = vld [vmem:[#allocation2 + $0x18] sm:$0xff]
    %v49 = vld [vmem:[#allocation2 + $0x20] sm:$0xff]
    %v50 = vld [vmem:[#allocation2 + $0x28] sm:$0xff]
    %v51 = vld [vmem:[#allocation2 + $0x30] sm:$0xff]
    %v52 = vld [vmem:[#allocation2 + $0x38] sm:$0xff]
    %v53 = vld [vmem:[#allocation2 + $0x40] sm:$0xff]
    %v54 = vld [vmem:[#allocation2 + $0x48] sm:$0xff]
    %v55 = vld [vmem:[#allocation2 + $0x50] sm:$0xff]
    %v56 = vld [vmem:[#allocation2 + $0x58] sm:$0xff]
    %v57 = vld [vmem:[#allocation2 + $0x60] sm:$0xff]
    %v58 = vld [vmem:[#allocation2 + $0x68] sm:$0xff]
    %v59 = vld [vmem:[#allocation2 + $0x70] sm:$0xff]
    %v60 = vld [vmem:[#allocation2 + $0x78] sm:$0xff]
    %v61 = vld [vmem:[#allocation2 + $0x80] sm:$0xff]
    %v62 = vld [vmem:[#allocation2 + $0x88] sm:$0xff]
    %v63 = vld [vmem:[#allocation2 + $0x90] sm:$0xff]
    %v64 = vld [vmem:[#allocation2 + $0x98] sm:$0xff]
    %v65 = vld [vmem:[#allocation2 + $0xa0] sm:$0xff]
    %v66 = vld [vmem:[#allocation2 + $0xa8] sm:$0xff]
    %v67 = vld [vmem:[#allocation2 + $0xb0] sm:$0xff]
    %v68 = vld [vmem:[#allocation2 + $0xb8] sm:$0xff]
    %v69 = vld [vmem:[#allocation2 + $0xc0] sm:$0xff]
    %v70 = vld [vmem:[#allocation2 + $0xc8] sm:$0xff]
    %v71 = vld [vmem:[#allocation2 + $0xd0] sm:$0xff]
    %v72 = vld [vmem:[#allocation2 + $0xd8] sm:$0xff]
    %v73 = vld [vmem:[#allocation2 + $0xe0] sm:$0xff]
    %v74 = vld [vmem:[#allocation2 + $0xe8] sm:$0xff]
    %v75 = vld [vmem:[#allocation2 + $0xf0] sm:$0xff]
    %v76 = vld [vmem:[#allocation2 + $0xf8] sm:$0xff]
    %v77 = vld [vmem:[#allocation2 + $0x100] sm:$0xff]
    %v78 = vld [vmem:[#allocation2 + $0x108] sm:$0xff]
    %v79 = vld [vmem:[#allocation2 + $0x110] sm:$0xff]
    %v80 = vld [vmem:[#allocation2 + $0x118] sm:$0xff]
    %v81 = vld [vmem:[#allocation2 + $0x120] sm:$0xff]
    %v82 = vld [vmem:[#allocation2 + $0x128] sm:$0xff]
    %v83 = vld [vmem:[#allocation2 + $0x130] sm:$0xff]
    %v84 = vld [vmem:[#allocation2 + $0x138] sm:$0xff]
    %v85 = vld [vmem:[#allocation2 + $0x140] sm:$0xff]
    %v86 = vld [vmem:[#allocation2 + $0x148] sm:$0xff]
    %v87 = vld [vmem:[#allocation2 + $0x150] sm:$0xff]
    %v88 = vld [vmem:[#allocation2 + $0x158] sm:$0xff]
    %v89 = vld [vmem:[#allocation2 + $0x160] sm:$0xff]
    %v90 = vld [vmem:[#allocation2 + $0x168] sm:$0xff]
    %v91 = vld [vmem:[#allocation2 + $0x170] sm:$0xff]
    %v92 = vld [vmem:[#allocation2 + $0x178] sm:$0xff]
    %v93 = vld [vmem:[#allocation2 + $0x180] sm:$0xff]
    %v94 = vld [vmem:[#allocation2 + $0x188] sm:$0xff]
    %v95 = vld [vmem:[#allocation2 + $0x190] sm:$0xff]
    %v96 = vld [vmem:[#allocation2 + $0x198] sm:$0xff]
    %v97 = vld [vmem:[#allocation2 + $0x1a0] sm:$0xff]
    %v98 = vld [vmem:[#allocation2 + $0x1a8] sm:$0xff]
    %v99 = vld [vmem:[#allocation2 + $0x1b0] sm:$0xff]
    %v100 = vld [vmem:[#allocation2 + $0x1b8] sm:$0xff]
    %v101 = vld [vmem:[#allocation2 + $0x1c0] sm:$0xff]
    %v102 = vld [vmem:[#allocation2 + $0x1c8] sm:$0xff]
    %v103 = vld [vmem:[#allocation2 + $0x1d0] sm:$0xff]
    %v104 = vld [vmem:[#allocation2 + $0x1d8] sm:$0xff]
    %v105 = vld [vmem:[#allocation2 + $0x1e0] sm:$0xff]
    %v106 = vld [vmem:[#allocation2 + $0x1e8] sm:$0xff]
    %v107 = vld [vmem:[#allocation2 + $0x1f0] sm:$0xff]
    %v108 = vld [vmem:[#allocation2 + $0x1f8] sm:$0xff]
    %v109 = vld [vmem:[#allocation2 + $0x200] sm:$0xff]
    %v110 = vld [vmem:[#allocation2 + $0x208] sm:$0xff]
    %v111 = vld [vmem:[#allocation2 + $0x210] sm:$0xff]
    %v112 = vld [vmem:[#allocation2 + $0x218] sm:$0xff]
    %v113 = vld [vmem:[#allocation2 + $0x220] sm:$0xff]
    %v114 = vld [vmem:[#allocation2 + $0x228] sm:$0xff]
    %v115 = vld [vmem:[#allocation2 + $0x230] sm:$0xff]
    %v116 = vld [vmem:[#allocation2 + $0x238] sm:$0xff]
    %v117 = vld [vmem:[#allocation2 + $0x240] sm:$0xff]
    %v118 = vld [vmem:[#allocation2 + $0x248] sm:$0xff]
    %v119 = vld [vmem:[#allocation2 + $0x250] sm:$0xff]
    %v120 = vld [vmem:[#allocation2 + $0x258] sm:$0xff]
    %v121 = vld [vmem:[#allocation2 + $0x260] sm:$0xff]
    %v122 = vld [vmem:[#allocation2 + $0x268] sm:$0xff]
    %v123 = vld [vmem:[#allocation2 + $0x270] sm:$0xff]
    %v124 = vld [vmem:[#allocation2 + $0x278] sm:$0xff]
    %v125 = vld [vmem:[#allocation2 + $0x280] sm:$0xff]
    %v126 = vld [vmem:[#allocation2 + $0x288] sm:$0xff]
    %v127 = vld [vmem:[#allocation2 + $0x290] sm:$0xff]
    %v128 = vld [vmem:[#allocation2 + $0x298] sm:$0xff]
    %v129 = vld [vmem:[#allocation2 + $0x2a0] sm:$0xff]
    %v130 = vld [vmem:[#allocation2 + $0x2a8] sm:$0xff]
    %v131 = vld [vmem:[#allocation2 + $0x2b0] sm:$0xff]
    %v132 = vld [vmem:[#allocation2 + $0x2b8] sm:$0xff]
    %v133 = vld [vmem:[#allocation2 + $0x2c0] sm:$0xff]
    %v134 = vld [vmem:[#allocation2 + $0x2c8] sm:$0xff]
    %v135 = vld [vmem:[#allocation2 + $0x2d0] sm:$0xff]
    %v136 = vld [vmem:[#allocation2 + $0x2d8] sm:$0xff]
    %v137 = vld [vmem:[#allocation2 + $0x2e0] sm:$0xff]
    %v138 = vld [vmem:[#allocation2 + $0x2e8] sm:$0xff]
    %v139 = vld [vmem:[#allocation2 + $0x2f0] sm:$0xff]
    %v140 = vld [vmem:[#allocation2 + $0x2f8] sm:$0xff]
    %v141 = vld [vmem:[#allocation2 + $0x300] sm:$0xff]
    %v142 = vld [vmem:[#allocation2 + $0x308] sm:$0xff]
    %v143 = vld [vmem:[#allocation2 + $0x310] sm:$0xff]
    %v144 = vld [vmem:[#allocation2 + $0x318] sm:$0xff]
    %v145 = vld [vmem:[#allocation2 + $0x320] sm:$0xff]
    %v146 = vld [vmem:[#allocation2 + $0x328] sm:$0xff]
    %v147 = vld [vmem:[#allocation2 + $0x330] sm:$0xff]
    %v148 = vld [vmem:[#allocation2 + $0x338] sm:$0xff]
    %v149 = vld [vmem:[#allocation2 + $0x340] sm:$0xff]
    %v150 = vld [vmem:[#allocation2 + $0x348] sm:$0xff]
    %v151 = vld [vmem:[#allocation2 + $0x350] sm:$0xff]
    %v152 = vld [vmem:[#allocation2 + $0x358] sm:$0xff]
    %v153 = vld [vmem:[#allocation2 + $0x360] sm:$0xff]
    %v154 = vld [vmem:[#allocation2 + $0x368] sm:$0xff]
    %v155 = vld [vmem:[#allocation2 + $0x370] sm:$0xff]
    %v156 = vld [vmem:[#allocation2 + $0x378] sm:$0xff]
    %v157 = vld [vmem:[#allocation2 + $0x380] sm:$0xff]
    %v158 = vld [vmem:[#allocation2 + $0x388] sm:$0xff]
    %v159 = vld [vmem:[#allocation2 + $0x390] sm:$0xff]
    %v160 = vld [vmem:[#allocation2 + $0x398] sm:$0xff]
    %v161 = vld [vmem:[#allocation2 + $0x3a0] sm:$0xff]
    %v162 = vld [vmem:[#allocation2 + $0x3a8] sm:$0xff]
    %v163 = vld [vmem:[#allocation2 + $0x3b0] sm:$0xff]
    %v164 = vld [vmem:[#allocation2 + $0x3b8] sm:$0xff]
    %v165 = vld [vmem:[#allocation2 + $0x3c0] sm:$0xff]
    %v166 = vld [vmem:[#allocation2 + $0x3c8] sm:$0xff]
    %v167 = vld [vmem:[#allocation2 + $0x3d0] sm:$0xff]
    %v168 = vld [vmem:[#allocation2 + $0x3d8] sm:$0xff]
    %v169 = vld [vmem:[#allocation2 + $0x3e0] sm:$0xff]
    %v170 = vld [vmem:[#allocation2 + $0x3e8] sm:$0xff]
    %v171 = vld [vmem:[#allocation2 + $0x3f0] sm:$0xff]
    %v172 = vld [vmem:[#allocation2 + $0x3f8] sm:$0xff]
    %v173 = vld [vmem:[#allocation2 + $0x400] sm:$0xff]
    %v174 = vld [vmem:[#allocation2 + $0x408] sm:$0xff]
    %v175 = vld [vmem:[#allocation2 + $0x410] sm:$0xff]
    %v176 = vld [vmem:[#allocation2 + $0x418] sm:$0xff]
    %v177 = vld [vmem:[#allocation2 + $0x420] sm:$0xff]
    %v178 = vld [vmem:[#allocation2 + $0x428] sm:$0xff]
    %v179 = vld [vmem:[#allocation2 + $0x430] sm:$0xff]
    %v180 = vld [vmem:[#allocation2 + $0x438] sm:$0xff]
    %v181 = vld [vmem:[#allocation2 + $0x440] sm:$0xff]
    %v182 = vld [vmem:[#allocation2 + $0x448] sm:$0xff]
    %v183 = vld [vmem:[#allocation2 + $0x450] sm:$0xff]
    %v184 = vld [vmem:[#allocation2 + $0x458] sm:$0xff]
    %v185 = vld [vmem:[#allocation2 + $0x460] sm:$0xff]
    %v186 = vld [vmem:[#allocation2 + $0x468] sm:$0xff]
    %v187 = vld [vmem:[#allocation2 + $0x470] sm:$0xff]
    %v188 = vld [vmem:[#allocation2 + $0x478] sm:$0xff]
    %v189 = vld [vmem:[#allocation2 + $0x480] sm:$0xff]
    %v190 = vld [vmem:[#allocation2 + $0x488] sm:$0xff]
    %v191 = vld [vmem:[#allocation2 + $0x490] sm:$0xff]
    %v192 = vld [vmem:[#allocation2 + $0x498] sm:$0xff]
    %v193 = vld [vmem:[#allocation2 + $0x4a0] sm:$0xff]
    %v194 = vld [vmem:[#allocation2 + $0x4a8] sm:$0xff]
    %v195 = vld [vmem:[#allocation2 + $0x4b0] sm:$0xff]
    %v196 = vld [vmem:[#allocation2 + $0x4b8] sm:$0xff]
    %v197 = vld [vmem:[#allocation2 + $0x4c0] sm:$0xff]
    %v198 = vld [vmem:[#allocation2 + $0x4c8] sm:$0xff]
    %v199 = vld [vmem:[#allocation2 + $0x4d0] sm:$0xff]
    %v200 = vld [vmem:[#allocation2 + $0x4d8] sm:$0xff]
    %v201 = vld [vmem:[#allocation2 + $0x4e0] sm:$0xff]
    %v202 = vld [vmem:[#allocation2 + $0x4e8] sm:$0xff]
    %v203 = vld [vmem:[#allocation2 + $0x4f0] sm:$0xff]
    %v204 = vld [vmem:[#allocation2 + $0x4f8] sm:$0xff]
    %vm205 = vcmask 261120
    %v207 = vsel %vm205, %v32, 0
    %v210 = vsel %vm205, %v34, 0
    %v213 = vsel %vm205, %v36, 0
    %v216 = vsel %vm205, %v38, 0
    %v219 = vsel %vm205, %v40, 0
    %v222 = vsel %vm205, %v42, 0
    %v225 = vsel %vm205, %v44, 0
    %227 = vmatprep.subr.mxu0 %v46
    %228 = vmatpush1.msra.mxu0 %v45
    %229 = vmatprep.subr.mxu0 %v54
    %230 = vmatpush1.msra.mxu0 %v53
    %231 = vmatprep.subr.mxu0 %v62
    %232 = vmatpush1.msra.mxu0 %v61
    %233 = vmatprep.subr.mxu0 %v70
    %234 = vmatpush1.msra.mxu0 %v69
    %235 = vmatprep.subr.mxu0 %v78
    %236 = vmatpush1.msra.mxu0 %v77
    %237 = vmatprep.subr.mxu0 %v86
    %238 = vmatpush1.msra.mxu0 %v85
    %239 = vmatprep.subr.mxu0 %v94
    %240 = vmatpush1.msra.mxu0 %v93
    %241 = vmatprep.subr.mxu0 %v102
    %242 = vmatpush1.msra.mxu0 %v101
    %243 = vmatprep.subr.mxu0 %v110
    %244 = vmatpush1.msra.mxu0 %v109
    %245 = vmatprep.subr.mxu0 %v118
    %246 = vmatpush1.msra.mxu0 %v117
    %247 = vmatprep.subr.mxu0 %v126
    %248 = vmatpush1.msra.mxu0 %v125
    %249 = vmatprep.subr.mxu0 %v134
    %250 = vmatpush1.msra.mxu0 %v133
    %251 = vmatprep.subr.mxu0 %v142
    %252 = vmatpush1.msra.mxu0 %v141
    %253 = vmatprep.subr.mxu0 %v150
    %254 = vmatpush1.msra.mxu0 %v149
    %255 = vmatprep.subr.mxu0 %v158
    %256 = vmatpush1.msra.mxu0 %v157
    %257 = vmatprep.subr.mxu0 %v166
    %258 = vmatpush1.msra.mxu0 %v165
    %259 = vmatprep.subr.mxu0 %v174
    %260 = vmatpush1.msra.mxu0 %v173
    %261 = vmatprep.subr.mxu0 %v182
    %262 = vmatpush1.msra.mxu0 %v181
    %263 = vmatprep.subr.mxu0 %v190
    %264 = vmatpush1.msra.mxu0 %v189
    %265 = vmatprep.subr.mxu0 %v198
    %266 = vmatpush1.msra.mxu0 %v197
    %267 = vmatprep.subr.mxu0 0.0
    %268 = vmatpush1.msra.mxu0 0.0
    %269 = vmatprep.subr.mxu0 0.0
    %270 = vmatpush1.msra.mxu0 0.0
    %271 = vmatprep.subr.mxu0 0.0
    %272 = vmatpush1.msra.mxu0 0.0
    %273 = vmatprep.subr.mxu0 0.0
    %274 = vmatpush1.msra.mxu0 0.0
    %275 = vmatprep.subr.mxu0 0.0
    %276 = vmatpush1.msra.mxu0 0.0
    %277 = vmatprep.subr.mxu0 0.0
    %278 = vmatpush1.msra.mxu0 0.0
    %279 = vmatprep.subr.mxu0 0.0
    %280 = vmatpush1.msra.mxu0 0.0
    %281 = vmatprep.subr.mxu0 0.0
    %282 = vmatpush1.msra.mxu0 0.0
    %283 = vmatprep.subr.mxu0 0.0
    %284 = vmatpush1.msra.mxu0 0.0
    %285 = vmatprep.subr.mxu0 0.0
    %286 = vmatpush1.msra.mxu0 0.0
    %287 = vmatprep.subr.mxu0 0.0
    %288 = vmatpush1.msra.mxu0 0.0
    %289 = vmatprep.subr.mxu0 0.0
    %290 = vmatpush1.msra.mxu0 0.0
    %291 = vmatprep.mubr.f32.mxu0 %v207
    %292 = vmatmul.mubr.f32.gmra.mrb[0].mxu0 %v31
    %v293 = vpop.f32.mrb[0].mxu0
    %v294 = vadd.f32 0.0, %v293
    %v295 = vpop.f32.mrb[0].mxu0
    %v296 = vadd.f32 0.0, %v295
    %297 = vmatprep.mubr.f32.mxu0 %v210
    %298 = vmatmul.mubr.f32.gmra.mrb[0].mxu0 %v33
    %v299 = vpop.f32.mrb[0].mxu0
    %v300 = vadd.f32 0.0, %v299
    %v301 = vpop.f32.mrb[0].mxu0
    %v302 = vadd.f32 0.0, %v301
    %303 = vmatprep.mubr.f32.mxu0 %v213
    %304 = vmatmul.mubr.f32.gmra.mrb[0].mxu0 %v35
    %v305 = vpop.f32.mrb[0].mxu0
    %v306 = vadd.f32 0.0, %v305
    %v307 = vpop.f32.mrb[0].mxu0
    %v308 = vadd.f32 0.0, %v307
    %309 = vmatprep.mubr.f32.mxu0 %v216
    %310 = vmatmul.mubr.f32.gmra.mrb[0].mxu0 %v37
    %v311 = vpop.f32.mrb[0].mxu0
    %v312 = vadd.f32 0.0, %v311
    %v313 = vpop.f32.mrb[0].mxu0
    %v314 = vadd.f32 0.0, %v313
    %315 = vmatprep.mubr.f32.mxu0 %v219
    %316 = vmatmul.mubr.f32.gmra.mrb[0].mxu0 %v39
    %v317 = vpop.f32.mrb[0].mxu0
    %v318 = vadd.f32 0.0, %v317
    %v319 = vpop.f32.mrb[0].mxu0
    %v320 = vadd.f32 0.0, %v319
    %321 = vmatprep.mubr.f32.mxu0 %v222
    %322 = vmatmul.mubr.f32.gmra.mrb[0].mxu0 %v41
    %v323 = vpop.f32.mrb[0].mxu0
    %v324 = vadd.f32 0.0, %v323
    %v325 = vpop.f32.mrb[0].mxu0
    %v326 = vadd.f32 0.0, %v325
    %327 = vmatprep.mubr.f32.mxu0 %v225
    %328 = vmatmul.mubr.f32.gmra.mrb[0].mxu0 %v43
    %v329 = vpop.f32.mrb[0].mxu0
    %v330 = vadd.f32 0.0, %v329
    %v331 = vpop.f32.mrb[0].mxu0
    %v332 = vadd.f32 0.0, %v331
    %333 = vdwg.mxu0
    %334 = vmatprep.subr.mxu0 %v48
    %335 = vmatpush1.msra.mxu0 %v47
    %336 = vmatprep.subr.mxu0 %v56
    %337 = vmatpush1.msra.mxu0 %v55
    %338 = vmatprep.subr.mxu0 %v64
    %339 = vmatpush1.msra.mxu0 %v63
    %340 = vmatprep.subr.mxu0 %v72
    %341 = vmatpush1.msra.mxu0 %v71
    %342 = vmatprep.subr.mxu0 %v80
    %343 = vmatpush1.msra.mxu0 %v79
    %344 = vmatprep.subr.mxu0 %v88
    %345 = vmatpush1.msra.mxu0 %v87
    %346 = vmatprep.subr.mxu0 %v96
    %347 = vmatpush1.msra.mxu0 %v95
    %348 = vmatprep.subr.mxu0 %v104
    %349 = vmatpush1.msra.mxu0 %v103
    %350 = vmatprep.subr.mxu0 %v112
    %351 = vmatpush1.msra.mxu0 %v111
    %352 = vmatprep.subr.mxu0 %v120
    %353 = vmatpush1.msra.mxu0 %v119
    %354 = vmatprep.subr.mxu0 %v128
    %355 = vmatpush1.msra.mxu0 %v127
    %356 = vmatprep.subr.mxu0 %v136
    %357 = vmatpush1.msra.mxu0 %v135
    %358 = vmatprep.subr.mxu0 %v144
    %359 = vmatpush1.msra.mxu0 %v143
    %360 = vmatprep.subr.mxu0 %v152
    %361 = vmatpush1.msra.mxu0 %v151
    %362 = vmatprep.subr.mxu0 %v160
    %363 = vmatpush1.msra.mxu0 %v159
    %364 = vmatprep.subr.mxu0 %v168
    %365 = vmatpush1.msra.mxu0 %v167
    %366 = vmatprep.subr.mxu0 %v176
    %367 = vmatpush1.msra.mxu0 %v175
    %368 = vmatprep.subr.mxu0 %v184
    %369 = vmatpush1.msra.mxu0 %v183
    %370 = vmatprep.subr.mxu0 %v192
    %371 = vmatpush1.msra.mxu0 %v191
    %372 = vmatprep.subr.mxu0 %v200
    %373 = vmatpush1.msra.mxu0 %v199
    %374 = vmatprep.subr.mxu0 0.0
    %375 = vmatpush1.msra.mxu0 0.0
    %376 = vmatprep.subr.mxu0 0.0
    %377 = vmatpush1.msra.mxu0 0.0
    %378 = vmatprep.subr.mxu0 0.0
    %379 = vmatpush1.msra.mxu0 0.0
    %380 = vmatprep.subr.mxu0 0.0
    %381 = vmatpush1.msra.mxu0 0.0
    %382 = vmatprep.subr.mxu0 0.0
    %383 = vmatpush1.msra.mxu0 0.0
    %384 = vmatprep.subr.mxu0 0.0
    %385 = vmatpush1.msra.mxu0 0.0
    %386 = vmatprep.subr.mxu0 0.0
    %387 = vmatpush1.msra.mxu0 0.0
    %388 = vmatprep.subr.mxu0 0.0
    %389 = vmatpush1.msra.mxu0 0.0
    %390 = vmatprep.subr.mxu0 0.0
    %391 = vmatpush1.msra.mxu0 0.0
    %392 = vmatprep.subr.mxu0 0.0
    %393 = vmatpush1.msra.mxu0 0.0
    %394 = vmatprep.subr.mxu0 0.0
    %395 = vmatpush1.msra.mxu0 0.0
    %396 = vmatprep.subr.mxu0 0.0
    %397 = vmatpush1.msra.mxu0 0.0
    %398 = vmatprep.mubr.f32.mxu0 %v207
    %399 = vmatmul.mubr.f32.gmra.mrb[0].mxu0 %v31
    %v400 = vpop.f32.mrb[0].mxu0
    %v401 = vadd.f32 0.0, %v400
    %v402 = vpop.f32.mrb[0].mxu0
    %v403 = vadd.f32 0.0, %v402
    %404 = vmatprep.mubr.f32.mxu0 %v210
    %405 = vmatmul.mubr.f32.gmra.mrb[0].mxu0 %v33
    %v406 = vpop.f32.mrb[0].mxu0
    %v407 = vadd.f32 0.0, %v406
    %v408 = vpop.f32.mrb[0].mxu0
    %v409 = vadd.f32 0.0, %v408
    %410 = vmatprep.mubr.f32.mxu0 %v213
    %411 = vmatmul.mubr.f32.gmra.mrb[0].mxu0 %v35
    %v412 = vpop.f32.mrb[0].mxu0
    %v413 = vadd.f32 0.0, %v412
    %v414 = vpop.f32.mrb[0].mxu0
    %v415 = vadd.f32 0.0, %v414
    %416 = vmatprep.mubr.f32.mxu0 %v216
    %417 = vmatmul.mubr.f32.gmra.mrb[0].mxu0 %v37
    %v418 = vpop.f32.mrb[0].mxu0
    %v419 = vadd.f32 0.0, %v418
    %v420 = vpop.f32.mrb[0].mxu0
    %v421 = vadd.f32 0.0, %v420
    %422 = vmatprep.mubr.f32.mxu0 %v219
    %423 = vmatmul.mubr.f32.gmra.mrb[0].mxu0 %v39
    %v424 = vpop.f32.mrb[0].mxu0
    %v425 = vadd.f32 0.0, %v424
    %v426 = vpop.f32.mrb[0].mxu0
    %v427 = vadd.f32 0.0, %v426
    %428 = vmatprep.mubr.f32.mxu0 %v222
    %429 = vmatmul.mubr.f32.gmra.mrb[0].mxu0 %v41
    %v430 = vpop.f32.mrb[0].mxu0
    %v431 = vadd.f32 0.0, %v430
    %v432 = vpop.f32.mrb[0].mxu0
    %v433 = vadd.f32 0.0, %v432
    %434 = vmatprep.mubr.f32.mxu0 %v225
    %435 = vmatmul.mubr.f32.gmra.mrb[0].mxu0 %v43
    %v436 = vpop.f32.mrb[0].mxu0
    %v437 = vadd.f32 0.0, %v436
    %v438 = vpop.f32.mrb[0].mxu0
    %v439 = vadd.f32 0.0, %v438
    %440 = vdwg.mxu0
    %441 = vmatprep.subr.mxu0 %v50
    %442 = vmatpush1.msra.mxu0 %v49
    %443 = vmatprep.subr.mxu0 %v58
    %444 = vmatpush1.msra.mxu0 %v57
    %445 = vmatprep.subr.mxu0 %v66
    %446 = vmatpush1.msra.mxu0 %v65
    %447 = vmatprep.subr.mxu0 %v74
    %448 = vmatpush1.msra.mxu0 %v73
    %449 = vmatprep.subr.mxu0 %v82
    %450 = vmatpush1.msra.mxu0 %v81
    %451 = vmatprep.subr.mxu0 %v90
    %452 = vmatpush1.msra.mxu0 %v89
    %453 = vmatprep.subr.mxu0 %v98
    %454 = vmatpush1.msra.mxu0 %v97
    %455 = vmatprep.subr.mxu0 %v106
    %456 = vmatpush1.msra.mxu0 %v105
    %457 = vmatprep.subr.mxu0 %v114
    %458 = vmatpush1.msra.mxu0 %v113
    %459 = vmatprep.subr.mxu0 %v122
    %460 = vmatpush1.msra.mxu0 %v121
    %461 = vmatprep.subr.mxu0 %v130
    %462 = vmatpush1.msra.mxu0 %v129
    %463 = vmatprep.subr.mxu0 %v138
    %464 = vmatpush1.msra.mxu0 %v137
    %465 = vmatprep.subr.mxu0 %v146
    %466 = vmatpush1.msra.mxu0 %v145
    %467 = vmatprep.subr.mxu0 %v154
    %468 = vmatpush1.msra.mxu0 %v153
    %469 = vmatprep.subr.mxu0 %v162
    %470 = vmatpush1.msra.mxu0 %v161
    %471 = vmatprep.subr.mxu0 %v170
    %472 = vmatpush1.msra.mxu0 %v169
    %473 = vmatprep.subr.mxu0 %v178
    %474 = vmatpush1.msra.mxu0 %v177
    %475 = vmatprep.subr.mxu0 %v186
    %476 = vmatpush1.msra.mxu0 %v185
    %477 = vmatprep.subr.mxu0 %v194
    %478 = vmatpush1.msra.mxu0 %v193
    %479 = vmatprep.subr.mxu0 %v202
    %480 = vmatpush1.msra.mxu0 %v201
    %481 = vmatprep.subr.mxu0 0.0
    %482 = vmatpush1.msra.mxu0 0.0
    %483 = vmatprep.subr.mxu0 0.0
    %484 = vmatpush1.msra.mxu0 0.0
    %485 = vmatprep.subr.mxu0 0.0
    %486 = vmatpush1.msra.mxu0 0.0
    %487 = vmatprep.subr.mxu0 0.0
    %488 = vmatpush1.msra.mxu0 0.0
    %489 = vmatprep.subr.mxu0 0.0
    %490 = vmatpush1.msra.mxu0 0.0
    %491 = vmatprep.subr.mxu0 0.0
    %492 = vmatpush1.msra.mxu0 0.0
    %493 = vmatprep.subr.mxu0 0.0
    %494 = vmatpush1.msra.mxu0 0.0
    %495 = vmatprep.subr.mxu0 0.0
    %496 = vmatpush1.msra.mxu0 0.0
    %497 = vmatprep.subr.mxu0 0.0
    %498 = vmatpush1.msra.mxu0 0.0
    %499 = vmatprep.subr.mxu0 0.0
    %500 = vmatpush1.msra.mxu0 0.0
    %501 = vmatprep.subr.mxu0 0.0
    %502 = vmatpush1.msra.mxu0 0.0
    %503 = vmatprep.subr.mxu0 0.0
    %504 = vmatpush1.msra.mxu0 0.0
    %505 = vmatprep.mubr.f32.mxu0 %v207
    %506 = vmatmul.mubr.f32.gmra.mrb[0].mxu0 %v31
    %v507 = vpop.f32.mrb[0].mxu0
    %v508 = vadd.f32 0.0, %v507
    %v509 = vpop.f32.mrb[0].mxu0
    %v510 = vadd.f32 0.0, %v509
    %511 = vmatprep.mubr.f32.mxu0 %v210
    %512 = vmatmul.mubr.f32.gmra.mrb[0].mxu0 %v33
    %v513 = vpop.f32.mrb[0].mxu0
    %v514 = vadd.f32 0.0, %v513
    %v515 = vpop.f32.mrb[0].mxu0
    %v516 = vadd.f32 0.0, %v515
    %517 = vmatprep.mubr.f32.mxu0 %v213
    %518 = vmatmul.mubr.f32.gmra.mrb[0].mxu0 %v35
    %v519 = vpop.f32.mrb[0].mxu0
    %v520 = vadd.f32 0.0, %v519
    %v521 = vpop.f32.mrb[0].mxu0
    %v522 = vadd.f32 0.0, %v521
    %523 = vmatprep.mubr.f32.mxu0 %v216
    %524 = vmatmul.mubr.f32.gmra.mrb[0].mxu0 %v37
    %v525 = vpop.f32.mrb[0].mxu0
    %v526 = vadd.f32 0.0, %v525
    %v527 = vpop.f32.mrb[0].mxu0
    %v528 = vadd.f32 0.0, %v527
    %529 = vmatprep.mubr.f32.mxu0 %v219
    %530 = vmatmul.mubr.f32.gmra.mrb[0].mxu0 %v39
    %v531 = vpop.f32.mrb[0].mxu0
    %v532 = vadd.f32 0.0, %v531
    %v533 = vpop.f32.mrb[0].mxu0
    %v534 = vadd.f32 0.0, %v533
    %535 = vmatprep.mubr.f32.mxu0 %v222
    %536 = vmatmul.mubr.f32.gmra.mrb[0].mxu0 %v41
    %v537 = vpop.f32.mrb[0].mxu0
    %v538 = vadd.f32 0.0, %v537
    %v539 = vpop.f32.mrb[0].mxu0
    %v540 = vadd.f32 0.0, %v539
    %541 = vmatprep.mubr.f32.mxu0 %v225
    %542 = vmatmul.mubr.f32.gmra.mrb[0].mxu0 %v43
    %v543 = vpop.f32.mrb[0].mxu0
    %v544 = vadd.f32 0.0, %v543
    %v545 = vpop.f32.mrb[0].mxu0
    %v546 = vadd.f32 0.0, %v545
    %547 = vdwg.mxu0
    %548 = vmatprep.subr.mxu0 %v52
    %549 = vmatpush1.msra.mxu0 %v51
    %550 = vmatprep.subr.mxu0 %v60
    %551 = vmatpush1.msra.mxu0 %v59
    %552 = vmatprep.subr.mxu0 %v68
    %553 = vmatpush1.msra.mxu0 %v67
    %554 = vmatprep.subr.mxu0 %v76
    %555 = vmatpush1.msra.mxu0 %v75
    %556 = vmatprep.subr.mxu0 %v84
    %557 = vmatpush1.msra.mxu0 %v83
    %558 = vmatprep.subr.mxu0 %v92
    %559 = vmatpush1.msra.mxu0 %v91
    %560 = vmatprep.subr.mxu0 %v100
    %561 = vmatpush1.msra.mxu0 %v99
    %562 = vmatprep.subr.mxu0 %v108
    %563 = vmatpush1.msra.mxu0 %v107
    %564 = vmatprep.subr.mxu0 %v116
    %565 = vmatpush1.msra.mxu0 %v115
    %566 = vmatprep.subr.mxu0 %v124
    %567 = vmatpush1.msra.mxu0 %v123
    %568 = vmatprep.subr.mxu0 %v132
    %569 = vmatpush1.msra.mxu0 %v131
    %570 = vmatprep.subr.mxu0 %v140
    %571 = vmatpush1.msra.mxu0 %v139
    %572 = vmatprep.subr.mxu0 %v148
    %573 = vmatpush1.msra.mxu0 %v147
    %574 = vmatprep.subr.mxu0 %v156
    %575 = vmatpush1.msra.mxu0 %v155
    %576 = vmatprep.subr.mxu0 %v164
    %577 = vmatpush1.msra.mxu0 %v163
    %578 = vmatprep.subr.mxu0 %v172
    %579 = vmatpush1.msra.mxu0 %v171
    %580 = vmatprep.subr.mxu0 %v180
    %581 = vmatpush1.msra.mxu0 %v179
    %582 = vmatprep.subr.mxu0 %v188
    %583 = vmatpush1.msra.mxu0 %v187
    %584 = vmatprep.subr.mxu0 %v196
    %585 = vmatpush1.msra.mxu0 %v195
    %586 = vmatprep.subr.mxu0 %v204
    %587 = vmatpush1.msra.mxu0 %v203
    %588 = vmatprep.subr.mxu0 0.0
    %589 = vmatpush1.msra.mxu0 0.0
    %590 = vmatprep.subr.mxu0 0.0
    %591 = vmatpush1.msra.mxu0 0.0
    %592 = vmatprep.subr.mxu0 0.0
    %593 = vmatpush1.msra.mxu0 0.0
    %594 = vmatprep.subr.mxu0 0.0
    %595 = vmatpush1.msra.mxu0 0.0
    %596 = vmatprep.subr.mxu0 0.0
    %597 = vmatpush1.msra.mxu0 0.0
    %598 = vmatprep.subr.mxu0 0.0
    %599 = vmatpush1.msra.mxu0 0.0
    %600 = vmatprep.subr.mxu0 0.0
    %601 = vmatpush1.msra.mxu0 0.0
    %602 = vmatprep.subr.mxu0 0.0
    %603 = vmatpush1.msra.mxu0 0.0
    %604 = vmatprep.subr.mxu0 0.0
    %605 = vmatpush1.msra.mxu0 0.0
    %606 = vmatprep.subr.mxu0 0.0
    %607 = vmatpush1.msra.mxu0 0.0
    %608 = vmatprep.subr.mxu0 0.0
    %609 = vmatpush1.msra.mxu0 0.0
    %610 = vmatprep.subr.mxu0 0.0
    %611 = vmatpush1.msra.mxu0 0.0
    %612 = vmatprep.mubr.f32.mxu0 %v207
    %613 = vmatmul.mubr.f32.gmra.mrb[0].mxu0 %v31
    %v614 = vpop.f32.mrb[0].mxu0
    %v615 = vadd.f32 0.0, %v614
    %v616 = vpop.f32.mrb[0].mxu0
    %v617 = vadd.f32 0.0, %v616
    %618 = vmatprep.mubr.f32.mxu0 %v210
    %619 = vmatmul.mubr.f32.gmra.mrb[0].mxu0 %v33
    %v620 = vpop.f32.mrb[0].mxu0
    %v621 = vadd.f32 0.0, %v620
    %v622 = vpop.f32.mrb[0].mxu0
    %v623 = vadd.f32 0.0, %v622
    %624 = vmatprep.mubr.f32.mxu0 %v213
    %625 = vmatmul.mubr.f32.gmra.mrb[0].mxu0 %v35
    %v626 = vpop.f32.mrb[0].mxu0
    %v627 = vadd.f32 0.0, %v626
    %v628 = vpop.f32.mrb[0].mxu0
    %v629 = vadd.f32 0.0, %v628
    %630 = vmatprep.mubr.f32.mxu0 %v216
    %631 = vmatmul.mubr.f32.gmra.mrb[0].mxu0 %v37
    %v632 = vpop.f32.mrb[0].mxu0
    %v633 = vadd.f32 0.0, %v632
    %v634 = vpop.f32.mrb[0].mxu0
    %v635 = vadd.f32 0.0, %v634
    %636 = vmatprep.mubr.f32.mxu0 %v219
    %637 = vmatmul.mubr.f32.gmra.mrb[0].mxu0 %v39
    %v638 = vpop.f32.mrb[0].mxu0
    %v639 = vadd.f32 0.0, %v638
    %v640 = vpop.f32.mrb[0].mxu0
    %v641 = vadd.f32 0.0, %v640
    %642 = vmatprep.mubr.f32.mxu0 %v222
    %643 = vmatmul.mubr.f32.gmra.mrb[0].mxu0 %v41
    %v644 = vpop.f32.mrb[0].mxu0
    %v645 = vadd.f32 0.0, %v644
    %v646 = vpop.f32.mrb[0].mxu0
    %v647 = vadd.f32 0.0, %v646
    %648 = vmatprep.mubr.f32.mxu0 %v225
    %649 = vmatmul.mubr.f32.gmra.mrb[0].mxu0 %v43
    %v650 = vpop.f32.mrb[0].mxu0
    %v651 = vadd.f32 0.0, %v650
    %v652 = vpop.f32.mrb[0].mxu0
    %v653 = vadd.f32 0.0, %v652
    %654 = vdwg.mxu0
    %v655 = vadd.f32 %v294, %v300
    %v656 = vadd.f32 %v655, %v306
    %v657 = vadd.f32 %v656, %v312
    %v658 = vadd.f32 %v657, %v318
    %v659 = vadd.f32 %v658, %v324
    %v660 = vadd.f32 %v659, %v330
    %v661 = vrot.slane %v660, 4
    %v662 = vadd.f32 %v660, %v661
    %v663 = vrot.slane %v662, 2
    %v664 = vadd.f32 %v662, %v663
    %v665 = vrot.slane %v664, 1
    %v666 = vadd.f32 %v664, %v665
    %v667 = vadd.f32 %v296, %v302
    %v668 = vadd.f32 %v667, %v308
    %v669 = vadd.f32 %v668, %v314
    %v670 = vadd.f32 %v669, %v320
    %v671 = vadd.f32 %v670, %v326
    %v672 = vadd.f32 %v671, %v332
    %v673 = vrot.slane %v672, 4
    %v674 = vadd.f32 %v672, %v673
    %v675 = vrot.slane %v674, 2
    %v676 = vadd.f32 %v674, %v675
    %v677 = vrot.slane %v676, 1
    %v678 = vadd.f32 %v676, %v677
    %v679 = vadd.f32 %v401, %v407
    %v680 = vadd.f32 %v679, %v413
    %v681 = vadd.f32 %v680, %v419
    %v682 = vadd.f32 %v681, %v425
    %v683 = vadd.f32 %v682, %v431
    %v684 = vadd.f32 %v683, %v437
    %v685 = vrot.slane %v684, 4
    %v686 = vadd.f32 %v684, %v685
    %v687 = vrot.slane %v686, 2
    %v688 = vadd.f32 %v686, %v687
    %v689 = vrot.slane %v688, 1
    %v690 = vadd.f32 %v688, %v689
    %v691 = vadd.f32 %v403, %v409
    %v692 = vadd.f32 %v691, %v415
    %v693 = vadd.f32 %v692, %v421
    %v694 = vadd.f32 %v693, %v427
    %v695 = vadd.f32 %v694, %v433
    %v696 = vadd.f32 %v695, %v439
    %v697 = vrot.slane %v696, 4
    %v698 = vadd.f32 %v696, %v697
    %v699 = vrot.slane %v698, 2
    %v700 = vadd.f32 %v698, %v699
    %v701 = vrot.slane %v700, 1
    %v702 = vadd.f32 %v700, %v701
    %v703 = vadd.f32 %v508, %v514
    %v704 = vadd.f32 %v703, %v520
    %v705 = vadd.f32 %v704, %v526
    %v706 = vadd.f32 %v705, %v532
    %v707 = vadd.f32 %v706, %v538
    %v708 = vadd.f32 %v707, %v544
    %v709 = vrot.slane %v708, 4
    %v710 = vadd.f32 %v708, %v709
    %v711 = vrot.slane %v710, 2
    %v712 = vadd.f32 %v710, %v711
    %v713 = vrot.slane %v712, 1
    %v714 = vadd.f32 %v712, %v713
    %v715 = vadd.f32 %v510, %v516
    %v716 = vadd.f32 %v715, %v522
    %v717 = vadd.f32 %v716, %v528
    %v718 = vadd.f32 %v717, %v534
    %v719 = vadd.f32 %v718, %v540
    %v720 = vadd.f32 %v719, %v546
    %v721 = vrot.slane %v720, 4
    %v722 = vadd.f32 %v720, %v721
    %v723 = vrot.slane %v722, 2
    %v724 = vadd.f32 %v722, %v723
    %v725 = vrot.slane %v724, 1
    %v726 = vadd.f32 %v724, %v725
    %v727 = vadd.f32 %v615, %v621
    %v728 = vadd.f32 %v727, %v627
    %v729 = vadd.f32 %v728, %v633
    %v730 = vadd.f32 %v729, %v639
    %v731 = vadd.f32 %v730, %v645
    %v732 = vadd.f32 %v731, %v651
    %v733 = vrot.slane %v732, 4
    %v734 = vadd.f32 %v732, %v733
    %v735 = vrot.slane %v734, 2
    %v736 = vadd.f32 %v734, %v735
    %v737 = vrot.slane %v736, 1
    %v738 = vadd.f32 %v736, %v737
    %v739 = vadd.f32 %v617, %v623
    %v740 = vadd.f32 %v739, %v629
    %v741 = vadd.f32 %v740, %v635
    %v742 = vadd.f32 %v741, %v641
    %v743 = vadd.f32 %v742, %v647
    %v744 = vadd.f32 %v743, %v653
    %v745 = vrot.slane %v744, 4
    %v746 = vadd.f32 %v744, %v745
    %v747 = vrot.slane %v746, 2
    %v748 = vadd.f32 %v746, %v747
    %v749 = vrot.slane %v748, 1
    %v750 = vadd.f32 %v748, %v749
    %v751 = vmul.f32 %v294, %v294
    %v752 = vmul.f32 %v296, %v296
    %v753 = vmul.f32 %v401, %v401
    %v754 = vmul.f32 %v403, %v403
    %v755 = vmul.f32 %v508, %v508
    %v756 = vmul.f32 %v510, %v510
    %v757 = vmul.f32 %v615, %v615
    %v758 = vmul.f32 %v617, %v617
    %v759 = vmul.f32 %v300, %v300
    %v760 = vmul.f32 %v302, %v302
    %v761 = vmul.f32 %v407, %v407
    %v762 = vmul.f32 %v409, %v409
    %v763 = vmul.f32 %v514, %v514
    %v764 = vmul.f32 %v516, %v516
    %v765 = vmul.f32 %v621, %v621
    %v766 = vmul.f32 %v623, %v623
    %v767 = vmul.f32 %v306, %v306
    %v768 = vmul.f32 %v308, %v308
    %v769 = vmul.f32 %v413, %v413
    %v770 = vmul.f32 %v415, %v415
    %v771 = vmul.f32 %v520, %v520
    %v772 = vmul.f32 %v522, %v522
    %v773 = vmul.f32 %v627, %v627
    %v774 = vmul.f32 %v629, %v629
    %v775 = vmul.f32 %v312, %v312
    %v776 = vmul.f32 %v314, %v314
    %v777 = vmul.f32 %v419, %v419
    %v778 = vmul.f32 %v421, %v421
    %v779 = vmul.f32 %v526, %v526
    %v780 = vmul.f32 %v528, %v528
    %v781 = vmul.f32 %v633, %v633
    %v782 = vmul.f32 %v635, %v635
    %v783 = vmul.f32 %v318, %v318
    %v784 = vmul.f32 %v320, %v320
    %v785 = vmul.f32 %v425, %v425
    %v786 = vmul.f32 %v427, %v427
    %v787 = vmul.f32 %v532, %v532
    %v788 = vmul.f32 %v534, %v534
    %v789 = vmul.f32 %v639, %v639
    %v790 = vmul.f32 %v641, %v641
    %v791 = vmul.f32 %v324, %v324
    %v792 = vmul.f32 %v326, %v326
    %v793 = vmul.f32 %v431, %v431
    %v794 = vmul.f32 %v433, %v433
    %v795 = vmul.f32 %v538, %v538
    %v796 = vmul.f32 %v540, %v540
    %v797 = vmul.f32 %v645, %v645
    %v798 = vmul.f32 %v647, %v647
    %v799 = vmul.f32 %v330, %v330
    %v800 = vmul.f32 %v332, %v332
    %v801 = vmul.f32 %v437, %v437
    %v802 = vmul.f32 %v439, %v439
    %v803 = vmul.f32 %v544, %v544
    %v804 = vmul.f32 %v546, %v546
    %v805 = vmul.f32 %v651, %v651
    %v806 = vmul.f32 %v653, %v653
    %v807 = vadd.f32 %v751, %v759
    %v808 = vadd.f32 %v807, %v767
    %v809 = vadd.f32 %v808, %v775
    %v810 = vadd.f32 %v809, %v783
    %v811 = vadd.f32 %v810, %v791
    %v812 = vadd.f32 %v811, %v799
    %v813 = vrot.slane %v812, 4
    %v814 = vadd.f32 %v812, %v813
    %v815 = vrot.slane %v814, 2
    %v816 = vadd.f32 %v814, %v815
    %v817 = vrot.slane %v816, 1
    %v818 = vadd.f32 %v816, %v817
    %v819 = vadd.f32 %v752, %v760
    %v820 = vadd.f32 %v819, %v768
    %v821 = vadd.f32 %v820, %v776
    %v822 = vadd.f32 %v821, %v784
    %v823 = vadd.f32 %v822, %v792
    %v824 = vadd.f32 %v823, %v800
    %v825 = vrot.slane %v824, 4
    %v826 = vadd.f32 %v824, %v825
    %v827 = vrot.slane %v826, 2
    %v828 = vadd.f32 %v826, %v827
    %v829 = vrot.slane %v828, 1
    %v830 = vadd.f32 %v828, %v829
    %v831 = vadd.f32 %v753, %v761
    %v832 = vadd.f32 %v831, %v769
    %v833 = vadd.f32 %v832, %v777
    %v834 = vadd.f32 %v833, %v785
    %v835 = vadd.f32 %v834, %v793
    %v836 = vadd.f32 %v835, %v801
    %v837 = vrot.slane %v836, 4
    %v838 = vadd.f32 %v836, %v837
    %v839 = vrot.slane %v838, 2
    %v840 = vadd.f32 %v838, %v839
    %v841 = vrot.slane %v840, 1
    %v842 = vadd.f32 %v840, %v841
    %v843 = vadd.f32 %v754, %v762
    %v844 = vadd.f32 %v843, %v770
    %v845 = vadd.f32 %v844, %v778
    %v846 = vadd.f32 %v845, %v786
    %v847 = vadd.f32 %v846, %v794
    %v848 = vadd.f32 %v847, %v802
    %v849 = vrot.slane %v848, 4
    %v850 = vadd.f32 %v848, %v849
    %v851 = vrot.slane %v850, 2
    %v852 = vadd.f32 %v850, %v851
    %v853 = vrot.slane %v852, 1
    %v854 = vadd.f32 %v852, %v853
    %v855 = vadd.f32 %v755, %v763
    %v856 = vadd.f32 %v855, %v771
    %v857 = vadd.f32 %v856, %v779
    %v858 = vadd.f32 %v857, %v787
    %v859 = vadd.f32 %v858, %v795
    %v860 = vadd.f32 %v859, %v803
    %v861 = vrot.slane %v860, 4
    %v862 = vadd.f32 %v860, %v861
    %v863 = vrot.slane %v862, 2
    %v864 = vadd.f32 %v862, %v863
    %v865 = vrot.slane %v864, 1
    %v866 = vadd.f32 %v864, %v865
    %v867 = vadd.f32 %v756, %v764
    %v868 = vadd.f32 %v867, %v772
    %v869 = vadd.f32 %v868, %v780
    %v870 = vadd.f32 %v869, %v788
    %v871 = vadd.f32 %v870, %v796
    %v872 = vadd.f32 %v871, %v804
    %v873 = vrot.slane %v872, 4
    %v874 = vadd.f32 %v872, %v873
    %v875 = vrot.slane %v874, 2
    %v876 = vadd.f32 %v874, %v875
    %v877 = vrot.slane %v876, 1
    %v878 = vadd.f32 %v876, %v877
    %v879 = vadd.f32 %v757, %v765
    %v880 = vadd.f32 %v879, %v773
    %v881 = vadd.f32 %v880, %v781
    %v882 = vadd.f32 %v881, %v789
    %v883 = vadd.f32 %v882, %v797
    %v884 = vadd.f32 %v883, %v805
    %v885 = vrot.slane %v884, 4
    %v886 = vadd.f32 %v884, %v885
    %v887 = vrot.slane %v886, 2
    %v888 = vadd.f32 %v886, %v887
    %v889 = vrot.slane %v888, 1
    %v890 = vadd.f32 %v888, %v889
    %v891 = vadd.f32 %v758, %v766
    %v892 = vadd.f32 %v891, %v774
    %v893 = vadd.f32 %v892, %v782
    %v894 = vadd.f32 %v893, %v790
    %v895 = vadd.f32 %v894, %v798
    %v896 = vadd.f32 %v895, %v806
    %v897 = vrot.slane %v896, 4
    %v898 = vadd.f32 %v896, %v897
    %v899 = vrot.slane %v898, 2
    %v900 = vadd.f32 %v898, %v899
    %v901 = vrot.slane %v900, 1
    %v902 = vadd.f32 %v900, %v901
    %v903 = vmul.f32 %v666, 0.020408163
    %v904 = vmul.f32 %v678, 0.020408163
    %v905 = vmul.f32 %v690, 0.020408163
    %v906 = vmul.f32 %v702, 0.020408163
    %v907 = vmul.f32 %v714, 0.020408163
    %v908 = vmul.f32 %v726, 0.020408163
    %v909 = vmul.f32 %v738, 0.020408163
    %v910 = vmul.f32 %v750, 0.020408163
    %v911 = vmul.f32 %v818, 0.020408163
    %v912 = vmul.f32 %v830, 0.020408163
    %v913 = vmul.f32 %v842, 0.020408163
    %v914 = vmul.f32 %v854, 0.020408163
    %v915 = vmul.f32 %v866, 0.020408163
    %v916 = vmul.f32 %v878, 0.020408163
    %v917 = vmul.f32 %v890, 0.020408163
    %v918 = vmul.f32 %v902, 0.020408163
    %v919 = vmul.f32 %v903, %v903
    %v920 = vmul.f32 %v904, %v904
    %v921 = vmul.f32 %v905, %v905
    %v922 = vmul.f32 %v906, %v906
    %v923 = vmul.f32 %v907, %v907
    %v924 = vmul.f32 %v908, %v908
    %v925 = vmul.f32 %v909, %v909
    %v926 = vmul.f32 %v910, %v910
    %v927 = vsub.f32 %v911, %v919
    %v928 = vsub.f32 %v912, %v920
    %v929 = vsub.f32 %v913, %v921
    %v930 = vsub.f32 %v914, %v922
    %v931 = vsub.f32 %v915, %v923
    %v932 = vsub.f32 %v916, %v924
    %v933 = vsub.f32 %v917, %v925
    %v934 = vsub.f32 %v918, %v926
    %v935 = vadd.f32 %v927, 0.001
    %v936 = vadd.f32 %v928, 0.001
    %v937 = vadd.f32 %v929, 0.001
    %v938 = vadd.f32 %v930, 0.001
    %v939 = vadd.f32 %v931, 0.001
    %v940 = vadd.f32 %v932, 0.001
    %v941 = vadd.f32 %v933, 0.001
    %v942 = vadd.f32 %v934, 0.001
    %v943 = vrsqrt.pop %v935
    %v944 = vrsqrt.pop %v936
    %v945 = vrsqrt.pop %v937
    %v946 = vrsqrt.pop %v938
    %v947 = vrsqrt.pop %v939
    %v948 = vrsqrt.pop %v940
    %v949 = vrsqrt.pop %v941
    %v950 = vrsqrt.pop %v942
    %v951 = vld [vmem:[%s2] sm:$0xff]
    %v953 = vlaneseq
    %v954 = vshrl.u32 %v953, 7
    %v955 = vsub.s32 0, %v954
    %v956 = vrot.slane %v951, %v955
    %v957 = vlaneseq
    %v958 = vshrl.u32 %v957, 7
    %v959 = vsub.s32 1, %v958
    %v960 = vrot.slane %v951, %v959
    %v961 = vlaneseq
    %v962 = vshrl.u32 %v961, 7
    %v963 = vsub.s32 2, %v962
    %v964 = vrot.slane %v951, %v963
    %v965 = vlaneseq
    %v966 = vshrl.u32 %v965, 7
    %v967 = vsub.s32 3, %v966
    %v968 = vrot.slane %v951, %v967
    %v969 = vlaneseq
    %v970 = vshrl.u32 %v969, 7
    %v971 = vsub.s32 4, %v970
    %v972 = vrot.slane %v951, %v971
    %v973 = vlaneseq
    %v974 = vshrl.u32 %v973, 7
    %v975 = vsub.s32 5, %v974
    %v976 = vrot.slane %v951, %v975
    %v977 = vlaneseq
    %v978 = vshrl.u32 %v977, 7
    %v979 = vsub.s32 6, %v978
    %v980 = vrot.slane %v951, %v979
    %v981 = vlaneseq
    %v982 = vshrl.u32 %v981, 7
    %v983 = vsub.s32 7, %v982
    %v984 = vrot.slane %v951, %v983
    %v993 = vmul.f32 %v943, %v956
    %v994 = vmul.f32 %v944, %v960
    %v995 = vmul.f32 %v945, %v964
    %v996 = vmul.f32 %v946, %v968
    %v997 = vmul.f32 %v947, %v972
    %v998 = vmul.f32 %v948, %v976
    %v999 = vmul.f32 %v949, %v980
    %v1000 = vmul.f32 %v950, %v984
    %v1001 = vld [vmem:[%s3] sm:$0xff]
    %v1002 = vmul.f32 %v903, %v993
    %v1003 = vmul.f32 %v904, %v994
    %v1004 = vmul.f32 %v905, %v995
    %v1005 = vmul.f32 %v906, %v996
    %v1006 = vmul.f32 %v907, %v997
    %v1007 = vmul.f32 %v908, %v998
    %v1008 = vmul.f32 %v909, %v999
    %v1009 = vmul.f32 %v910, %v1000
    %v1018 = vcombine.low %v1002, %v1003
    %v1019 = vcombine.low %v1004, %v1005
    %v1020 = vcombine.low %v1006, %v1007
    %v1021 = vcombine.low %v1008, %v1009
    %v1023 = vunpack.c.l.s4 1966171168
    %v1024 = vunpack.c.0.s8 %v1023
    %v1025 = vlaneseq
    %v1026 = vshrl.u32 %v1025, 7
    %v1027 = vsub.s32 %v1024, %v1026
    %v1028 = vrot.slane %v1018, %v1027
    %v1030 = vunpack.c.l.s4 1966171168
    %v1031 = vunpack.c.0.s8 %v1030
    %v1032 = vlaneseq
    %v1033 = vshrl.u32 %v1032, 7
    %v1034 = vsub.s32 %v1031, %v1033
    %v1035 = vrot.slane %v1019, %v1034
    %v1037 = vunpack.c.l.s4 1966171168
    %v1038 = vunpack.c.0.s8 %v1037
    %v1039 = vlaneseq
    %v1040 = vshrl.u32 %v1039, 7
    %v1041 = vsub.s32 %v1038, %v1040
    %v1042 = vrot.slane %v1020, %v1041
    %v1044 = vunpack.c.l.s4 1966171168
    %v1045 = vunpack.c.0.s8 %v1044
    %v1046 = vlaneseq
    %v1047 = vshrl.u32 %v1046, 7
    %v1048 = vsub.s32 %v1045, %v1047
    %v1049 = vrot.slane %v1021, %v1048
    %v1050 = vcombine.low %v1028, %v1035
    %v1051 = vcombine.low %v1042, %v1049
    %v1053 = vunpack.c.l.s4 1966171168
    %v1054 = vunpack.c.0.s8 %v1053
    %v1055 = vlaneseq
    %v1056 = vshrl.u32 %v1055, 7
    %v1057 = vsub.s32 %v1054, %v1056
    %v1058 = vrot.slane %v1050, %v1057
    %v1060 = vunpack.c.l.s4 1966171168
    %v1061 = vunpack.c.0.s8 %v1060
    %v1062 = vlaneseq
    %v1063 = vshrl.u32 %v1062, 7
    %v1064 = vsub.s32 %v1061, %v1063
    %v1065 = vrot.slane %v1051, %v1064
    %v1066 = vcombine.low %v1058, %v1065
    %v1068 = vsub.f32 %v1001, %v1066
    %v1069 = vlaneseq
    %v1070 = vshrl.u32 %v1069, 7
    %v1071 = vsub.s32 0, %v1070
    %v1072 = vrot.slane %v993, %v1071
    %v1073 = vlaneseq
    %v1074 = vshrl.u32 %v1073, 7
    %v1075 = vsub.s32 0, %v1074
    %v1076 = vrot.slane %v994, %v1075
    %v1077 = vlaneseq
    %v1078 = vshrl.u32 %v1077, 7
    %v1079 = vsub.s32 0, %v1078
    %v1080 = vrot.slane %v995, %v1079
    %v1081 = vlaneseq
    %v1082 = vshrl.u32 %v1081, 7
    %v1083 = vsub.s32 0, %v1082
    %v1084 = vrot.slane %v996, %v1083
    %v1085 = vlaneseq
    %v1086 = vshrl.u32 %v1085, 7
    %v1087 = vsub.s32 0, %v1086
    %v1088 = vrot.slane %v997, %v1087
    %v1089 = vlaneseq
    %v1090 = vshrl.u32 %v1089, 7
    %v1091 = vsub.s32 0, %v1090
    %v1092 = vrot.slane %v998, %v1091
    %v1093 = vlaneseq
    %v1094 = vshrl.u32 %v1093, 7
    %v1095 = vsub.s32 0, %v1094
    %v1096 = vrot.slane %v999, %v1095
    %v1097 = vlaneseq
    %v1098 = vshrl.u32 %v1097, 7
    %v1099 = vsub.s32 0, %v1098
    %v1100 = vrot.slane %v1000, %v1099
    %v1101 = vmul.f32 %v294, %v1072
    %v1102 = vmul.f32 %v296, %v1076
    %v1103 = vmul.f32 %v401, %v1080
    %v1104 = vmul.f32 %v403, %v1084
    %v1105 = vmul.f32 %v508, %v1088
    %v1106 = vmul.f32 %v510, %v1092
    %v1107 = vmul.f32 %v615, %v1096
    %v1108 = vmul.f32 %v617, %v1100
    %v1109 = vmul.f32 %v300, %v1072
    %v1110 = vmul.f32 %v302, %v1076
    %v1111 = vmul.f32 %v407, %v1080
    %v1112 = vmul.f32 %v409, %v1084
    %v1113 = vmul.f32 %v514, %v1088
    %v1114 = vmul.f32 %v516, %v1092
    %v1115 = vmul.f32 %v621, %v1096
    %v1116 = vmul.f32 %v623, %v1100
    %v1117 = vmul.f32 %v306, %v1072
    %v1118 = vmul.f32 %v308, %v1076
    %v1119 = vmul.f32 %v413, %v1080
    %v1120 = vmul.f32 %v415, %v1084
    %v1121 = vmul.f32 %v520, %v1088
    %v1122 = vmul.f32 %v522, %v1092
    %v1123 = vmul.f32 %v627, %v1096
    %v1124 = vmul.f32 %v629, %v1100
    %v1125 = vmul.f32 %v312, %v1072
    %v1126 = vmul.f32 %v314, %v1076
    %v1127 = vmul.f32 %v419, %v1080
    %v1128 = vmul.f32 %v421, %v1084
    %v1129 = vmul.f32 %v526, %v1088
    %v1130 = vmul.f32 %v528, %v1092
    %v1131 = vmul.f32 %v633, %v1096
    %v1132 = vmul.f32 %v635, %v1100
    %v1133 = vmul.f32 %v318, %v1072
    %v1134 = vmul.f32 %v320, %v1076
    %v1135 = vmul.f32 %v425, %v1080
    %v1136 = vmul.f32 %v427, %v1084
    %v1137 = vmul.f32 %v532, %v1088
    %v1138 = vmul.f32 %v534, %v1092
    %v1139 = vmul.f32 %v639, %v1096
    %v1140 = vmul.f32 %v641, %v1100
    %v1141 = vmul.f32 %v324, %v1072
    %v1142 = vmul.f32 %v326, %v1076
    %v1143 = vmul.f32 %v431, %v1080
    %v1144 = vmul.f32 %v433, %v1084
    %v1145 = vmul.f32 %v538, %v1088
    %v1146 = vmul.f32 %v540, %v1092
    %v1147 = vmul.f32 %v645, %v1096
    %v1148 = vmul.f32 %v647, %v1100
    %v1149 = vmul.f32 %v330, %v1072
    %v1150 = vmul.f32 %v332, %v1076
    %v1151 = vmul.f32 %v437, %v1080
    %v1152 = vmul.f32 %v439, %v1084
    %v1153 = vmul.f32 %v544, %v1088
    %v1154 = vmul.f32 %v546, %v1092
    %v1155 = vmul.f32 %v651, %v1096
    %v1156 = vmul.f32 %v653, %v1100
    %v1158 = vlaneseq
    %v1159 = vshrl.u32 %v1158, 7
    %v1160 = vsub.s32 0, %v1159
    %v1161 = vrot.slane %v1068, %v1160
    %v1162 = vlaneseq
    %v1163 = vshrl.u32 %v1162, 7
    %v1164 = vsub.s32 1, %v1163
    %v1165 = vrot.slane %v1068, %v1164
    %v1166 = vlaneseq
    %v1167 = vshrl.u32 %v1166, 7
    %v1168 = vsub.s32 2, %v1167
    %v1169 = vrot.slane %v1068, %v1168
    %v1170 = vlaneseq
    %v1171 = vshrl.u32 %v1170, 7
    %v1172 = vsub.s32 3, %v1171
    %v1173 = vrot.slane %v1068, %v1172
    %v1174 = vlaneseq
    %v1175 = vshrl.u32 %v1174, 7
    %v1176 = vsub.s32 4, %v1175
    %v1177 = vrot.slane %v1068, %v1176
    %v1178 = vlaneseq
    %v1179 = vshrl.u32 %v1178, 7
    %v1180 = vsub.s32 5, %v1179
    %v1181 = vrot.slane %v1068, %v1180
    %v1182 = vlaneseq
    %v1183 = vshrl.u32 %v1182, 7
    %v1184 = vsub.s32 6, %v1183
    %v1185 = vrot.slane %v1068, %v1184
    %v1186 = vlaneseq
    %v1187 = vshrl.u32 %v1186, 7
    %v1188 = vsub.s32 7, %v1187
    %v1189 = vrot.slane %v1068, %v1188
    %v1198 = vadd.f32 %v1101, %v1161
    %v1199 = vadd.f32 %v1102, %v1165
    %v1200 = vadd.f32 %v1103, %v1169
    %v1201 = vadd.f32 %v1104, %v1173
    %v1202 = vadd.f32 %v1105, %v1177
    %v1203 = vadd.f32 %v1106, %v1181
    %v1204 = vadd.f32 %v1107, %v1185
    %v1205 = vadd.f32 %v1108, %v1189
    %v1206 = vadd.f32 %v1109, %v1161
    %v1207 = vadd.f32 %v1110, %v1165
    %v1208 = vadd.f32 %v1111, %v1169
    %v1209 = vadd.f32 %v1112, %v1173
    %v1210 = vadd.f32 %v1113, %v1177
    %v1211 = vadd.f32 %v1114, %v1181
    %v1212 = vadd.f32 %v1115, %v1185
    %v1213 = vadd.f32 %v1116, %v1189
    %v1214 = vadd.f32 %v1117, %v1161
    %v1215 = vadd.f32 %v1118, %v1165
    %v1216 = vadd.f32 %v1119, %v1169
    %v1217 = vadd.f32 %v1120, %v1173
    %v1218 = vadd.f32 %v1121, %v1177
    %v1219 = vadd.f32 %v1122, %v1181
    %v1220 = vadd.f32 %v1123, %v1185
    %v1221 = vadd.f32 %v1124, %v1189
    %v1222 = vadd.f32 %v1125, %v1161
    %v1223 = vadd.f32 %v1126, %v1165
    %v1224 = vadd.f32 %v1127, %v1169
    %v1225 = vadd.f32 %v1128, %v1173
    %v1226 = vadd.f32 %v1129, %v1177
    %v1227 = vadd.f32 %v1130, %v1181
    %v1228 = vadd.f32 %v1131, %v1185
    %v1229 = vadd.f32 %v1132, %v1189
    %v1230 = vadd.f32 %v1133, %v1161
    %v1231 = vadd.f32 %v1134, %v1165
    %v1232 = vadd.f32 %v1135, %v1169
    %v1233 = vadd.f32 %v1136, %v1173
    %v1234 = vadd.f32 %v1137, %v1177
    %v1235 = vadd.f32 %v1138, %v1181
    %v1236 = vadd.f32 %v1139, %v1185
    %v1237 = vadd.f32 %v1140, %v1189
    %v1238 = vadd.f32 %v1141, %v1161
    %v1239 = vadd.f32 %v1142, %v1165
    %v1240 = vadd.f32 %v1143, %v1169
    %v1241 = vadd.f32 %v1144, %v1173
    %v1242 = vadd.f32 %v1145, %v1177
    %v1243 = vadd.f32 %v1146, %v1181
    %v1244 = vadd.f32 %v1147, %v1185
    %v1245 = vadd.f32 %v1148, %v1189
    %v1246 = vadd.f32 %v1149, %v1161
    %v1247 = vadd.f32 %v1150, %v1165
    %v1248 = vadd.f32 %v1151, %v1169
    %v1249 = vadd.f32 %v1152, %v1173
    %v1250 = vadd.f32 %v1153, %v1177
    %v1251 = vadd.f32 %v1154, %v1181
    %v1252 = vadd.f32 %v1155, %v1185
    %v1253 = vadd.f32 %v1156, %v1189
    %1254 = vst [vmem:[%s4] sm:$0xff] %v1198
    %1255 = vst [vmem:[%s4 + $0x8] sm:$0xff] %v1199
    %1256 = vst [vmem:[%s4 + $0x10] sm:$0xff] %v1200
    %1257 = vst [vmem:[%s4 + $0x18] sm:$0xff] %v1201
    %1258 = vst [vmem:[%s4 + $0x20] sm:$0xff] %v1202
    %1259 = vst [vmem:[%s4 + $0x28] sm:$0xff] %v1203
    %1260 = vst [vmem:[%s4 + $0x30] sm:$0xff] %v1204
    %1261 = vst [vmem:[%s4 + $0x38] sm:$0xff] %v1205
    %1262 = vst [vmem:[%s4 + $0x40] sm:$0xff] %v1206
    %1263 = vst [vmem:[%s4 + $0x48] sm:$0xff] %v1207
    %1264 = vst [vmem:[%s4 + $0x50] sm:$0xff] %v1208
    %1265 = vst [vmem:[%s4 + $0x58] sm:$0xff] %v1209
    %1266 = vst [vmem:[%s4 + $0x60] sm:$0xff] %v1210
    %1267 = vst [vmem:[%s4 + $0x68] sm:$0xff] %v1211
    %1268 = vst [vmem:[%s4 + $0x70] sm:$0xff] %v1212
    %1269 = vst [vmem:[%s4 + $0x78] sm:$0xff] %v1213
    %1270 = vst [vmem:[%s4 + $0x80] sm:$0xff] %v1214
    %1271 = vst [vmem:[%s4 + $0x88] sm:$0xff] %v1215
    %1272 = vst [vmem:[%s4 + $0x90] sm:$0xff] %v1216
    %1273 = vst [vmem:[%s4 + $0x98] sm:$0xff] %v1217
    %1274 = vst [vmem:[%s4 + $0xa0] sm:$0xff] %v1218
    %1275 = vst [vmem:[%s4 + $0xa8] sm:$0xff] %v1219
    %1276 = vst [vmem:[%s4 + $0xb0] sm:$0xff] %v1220
    %1277 = vst [vmem:[%s4 + $0xb8] sm:$0xff] %v1221
    %1278 = vst [vmem:[%s4 + $0xc0] sm:$0xff] %v1222
    %1279 = vst [vmem:[%s4 + $0xc8] sm:$0xff] %v1223
    %1280 = vst [vmem:[%s4 + $0xd0] sm:$0xff] %v1224
    %1281 = vst [vmem:[%s4 + $0xd8] sm:$0xff] %v1225
    %1282 = vst [vmem:[%s4 + $0xe0] sm:$0xff] %v1226
    %1283 = vst [vmem:[%s4 + $0xe8] sm:$0xff] %v1227
    %1284 = vst [vmem:[%s4 + $0xf0] sm:$0xff] %v1228
    %1285 = vst [vmem:[%s4 + $0xf8] sm:$0xff] %v1229
    %1286 = vst [vmem:[%s4 + $0x100] sm:$0xff] %v1230
    %1287 = vst [vmem:[%s4 + $0x108] sm:$0xff] %v1231
    %1288 = vst [vmem:[%s4 + $0x110] sm:$0xff] %v1232
    %1289 = vst [vmem:[%s4 + $0x118] sm:$0xff] %v1233
    %1290 = vst [vmem:[%s4 + $0x120] sm:$0xff] %v1234
    %1291 = vst [vmem:[%s4 + $0x128] sm:$0xff] %v1235
    %1292 = vst [vmem:[%s4 + $0x130] sm:$0xff] %v1236
    %1293 = vst [vmem:[%s4 + $0x138] sm:$0xff] %v1237
    %1294 = vst [vmem:[%s4 + $0x140] sm:$0xff] %v1238
    %1295 = vst [vmem:[%s4 + $0x148] sm:$0xff] %v1239
    %1296 = vst [vmem:[%s4 + $0x150] sm:$0xff] %v1240
    %1297 = vst [vmem:[%s4 + $0x158] sm:$0xff] %v1241
    %1298 = vst [vmem:[%s4 + $0x160] sm:$0xff] %v1242
    %1299 = vst [vmem:[%s4 + $0x168] sm:$0xff] %v1243
    %1300 = vst [vmem:[%s4 + $0x170] sm:$0xff] %v1244
    %1301 = vst [vmem:[%s4 + $0x178] sm:$0xff] %v1245
    %1302 = vst [vmem:[%s4 + $0x180] sm:$0xff] %v1246
    %1303 = vst [vmem:[%s4 + $0x188] sm:$0xff] %v1247
    %1304 = vst [vmem:[%s4 + $0x190] sm:$0xff] %v1248
    %1305 = vst [vmem:[%s4 + $0x198] sm:$0xff] %v1249
    %1306 = vst [vmem:[%s4 + $0x1a0] sm:$0xff] %v1250
    %1307 = vst [vmem:[%s4 + $0x1a8] sm:$0xff] %v1251
    %1308 = vst [vmem:[%s4 + $0x1b0] sm:$0xff] %v1252
    %1309 = vst [vmem:[%s4 + $0x1b8] sm:$0xff] %v1253
    // Predicated region
    $region22: #{conv1x1_bn.1} parent=1 // pred_check
      _
    $region23: #{conv1x1_bn.1} parent=1 // pred_check_branch
      %1311 = sbr.rel (0) target = $region25
    $region24: #{conv1x1_bn.1} parent=1 // pred_region
      _
    $region25: #{conv1x1_bn.1} parent=1 // pred_fallthru
      _
    // Predicated region
    $region26: #{conv1x1_bn.1} parent=1 // pred_check
      _
    $region27: #{conv1x1_bn.1} parent=1 // pred_check_branch
      %1313 = sbr.rel (0) target = $region29
    $region28: #{conv1x1_bn.1} parent=1 // pred_region
      _
    $region29: #{conv1x1_bn.1} parent=1 // pred_fallthru
      _
    %1314 = vsyncpa [#allocation3], 1

</llo_original>
